<compile_context>
chip_gen: v5e
topology: v5e:2x2
jax: 0.10.0
libtpu: 0.0.40
codegen_flags: <defaults>
</compile_context>

<pallas_src>
import functools

import jax
import jax.numpy as jnp
from jax.experimental import pallas as pl
from jax.experimental.pallas import tpu as pltpu


def _round_up(x, m):
    return (x + m - 1) // m * m


def _casrel_fused_kernel(
    enc_ref,     # (Bt, S, D)    compute dtype (bf16 in the demo)
    s2t_ref,     # (Bt, 1, S)    compute dtype (0/1 subject-span indicator)
    slen_ref,    # (Bt, 1, 1)    f32 subject length
    w_ref,       # (D, Npad)     compute dtype: [w_sh | w_st | w_oh | w_ot | 0]
    b_ref,       # (1, Npad)     f32 fused bias (0 in the padding)
    cmask_ref,   # (1, Npad)     f32: 1.0 on obj columns, 0.0 elsewhere
    out_ref,     # (Bt, S, Npad) compute dtype, fused sigmoid outputs
):
    bt, s, d = enc_ref.shape
    n_pad = w_ref.shape[1]

    enc = enc_ref[...]                       # (Bt, S, D)
    w = w_ref[...]                           # (D, Npad)

    # ---- Subject path, vectorized over the whole batch tile ----------------
    # pooled[b] = s2t[b] @ enc[b]  -> one batched MXU einsum, f32 accumulation.
    pooled = jnp.einsum("bks,bsd->bkd", s2t_ref[...], enc,
                        preferred_element_type=jnp.float32)     # (Bt, 1, D)
    # Normalize in f32 *before* any low-precision rounding (exact divide, no
    # approx reciprocal): bounds the magnitude to O(1) like the reference.
    sub = pooled[:, 0, :] / slen_ref[...][:, 0, :]              # (Bt, D) f32
    # Project the subject onto every fused head column in ONE MXU matmul,
    # keep only the obj columns, and fold in the fused bias.
    proj = jnp.dot(sub.astype(w.dtype), w,
                   preferred_element_type=jnp.float32)          # (Bt, Npad)
    addb = proj * cmask_ref[...] + b_ref[...]                   # (Bt, Npad)

    # ---- Main fused matmul: matmul -> +bias/+sub -> sigmoid -> store -------
    fused = jnp.dot(enc.reshape(bt * s, d), w,
                    preferred_element_type=jnp.float32)         # (Bt*S, Npad)
    fused = fused.reshape(bt, s, n_pad) + addb[:, None, :]
    out_ref[...] = jax.nn.sigmoid(fused).astype(out_ref.dtype)


def _vmem_policy():
    """Generation-aware VMEM/tiling policy."""
    try:
        cap = pltpu.get_tpu_info().vmem_capacity_bytes
    except Exception:
        cap = 64 << 20                       # conservative (v7x-class) default
    if cap <= (64 << 20):
        # v7x-class: 64 MiB VMEM per TC, 2 TensorCores -> modest tiles,
        # prefer >=4 grid steps with an even count (>=2 per core).
        return dict(budget=20 << 20, limit=40 << 20,
                    min_steps=4, prefer_even_steps=True)
    # v5e / v6e: 128 MiB VMEM, single TensorCore -> large tiles, >=2 steps.
    return dict(budget=48 << 20, limit=64 << 20,
                min_steps=2, prefer_even_steps=False)


def _pick_batch_tile(B, S, D, n_pad, in_itemsize, out_itemsize, policy):
    """Largest batch tile that (a) divides B, (b) keeps the double-buffered
    per-step working set (incl. the f32 matmul intermediate and the constant
    weight/bias buffers) under the generation budget, and (c) keeps enough
    grid steps for pipelining / megacore sharding."""
    per_elem = (2 * S * D * in_itemsize          # encoded_text, double-buffered
                + 2 * S * n_pad * out_itemsize   # fused output, double-buffered
                + S * n_pad * 4                  # f32 matmul intermediate
                + 2 * (S * in_itemsize + 4))     # s2t / sub_len (tiny)
    fixed = (2 * D * n_pad * in_itemsize         # fused weights, double-buffered
             + 2 * 2 * n_pad * 4)                # bias + column mask
    avail = max(policy["budget"] - fixed, per_elem)
    max_bt = max(1, avail // per_elem)

    min_steps = min(policy["min_steps"], B)
    best, best_score = 1, 0
    for bt in range(1, B + 1):
        if B % bt or bt > max_bt:
            continue
        steps = B // bt
        if steps < min_steps:
            continue
        # Prefer even step counts on 2-TC parts, then the largest tile.
        score = bt + (B if (policy["prefer_even_steps"] and steps % 2 == 0)
                      else 0)
        if score > best_score:
            best_score, best = score, bt
    return best


def prepare_casrel_head(params, compute_dtype=jnp.bfloat16):
    """Fuse the four head weights ONCE (hoisted out of the per-call path)."""
    R = params["w_oh"].shape[1]
    n = 2 + 2 * R
    # Keep Npad at 128 unless n > 128: the kernel is HBM-bound on the enc
    # read, so widening N only inflates the output write / VMEM footprint.
    n_pad = _round_up(n, 128)
    w_all = jnp.concatenate(
        [params["w_sh"], params["w_st"], params["w_oh"], params["w_ot"]],
        axis=1).astype(compute_dtype)
    w_all = jnp.pad(w_all, ((0, 0), (0, n_pad - n)))
    b_all = jnp.concatenate(
        [params["b_sh"], params["b_st"], params["b_oh"], params["b_ot"]],
        axis=1).astype(jnp.float32)
    b_all = jnp.pad(b_all, ((0, 0), (0, n_pad - n)))
    cmask = jnp.concatenate(
        [jnp.zeros((1, 2), jnp.float32),
         jnp.ones((1, 2 * R), jnp.float32),
         jnp.zeros((1, n_pad - n), jnp.float32)], axis=1)
    return {"w_all": w_all, "b_all": b_all, "cmask": cmask}


def casrel_head_pallas(encoded_text, sub_head2tail, sub_len, fused_head,
                       num_rel):
    """CasRel head (4 linear layers + sigmoid + subject pooling) on TPU.

    encoded_text:  (B, S, D)  (bf16 or f32; kernel computes in this dtype)
    sub_head2tail: (B, S)
    sub_len:       (B, 1)
    """
    B, S, D = encoded_text.shape
    cdtype = encoded_text.dtype
    out_dtype = cdtype           # bf16 output halves the padded slab HBM write

    w_all = fused_head["w_all"].astype(cdtype)
    b_all = fused_head["b_all"]
    cmask = fused_head["cmask"]
    n_pad = w_all.shape[1]
    R = num_rel

    s2t = sub_head2tail.reshape(B, 1, S).astype(cdtype)
    slen = sub_len.reshape(B, 1, 1).astype(jnp.float32)

    policy = _vmem_policy()
    bt = _pick_batch_tile(B, S, D, n_pad,
                          encoded_text.dtype.itemsize,
                          jnp.dtype(out_dtype).itemsize, policy)
    grid = (B // bt,)

    batch_idx = lambda i: (i, 0, 0)
    full_2d = lambda i: (0, 0)

    grid_spec = pltpu.PrefetchScalarGridSpec(
        num_scalar_prefetch=0,
        grid=grid,
        in_specs=[
            pl.BlockSpec((bt, S, D), batch_idx),     # encoded_text
            pl.BlockSpec((bt, 1, S), batch_idx),     # sub_head2tail
            pl.BlockSpec((bt, 1, 1), batch_idx),     # sub_len
            pl.BlockSpec((D, n_pad), full_2d),       # fused weights
            pl.BlockSpec((1, n_pad), full_2d),       # fused bias
            pl.BlockSpec((1, n_pad), full_2d),       # obj-column mask
        ],
        out_specs=pl.BlockSpec((bt, S, n_pad), batch_idx),
    )

    fused_out = pl.pallas_call(
        _casrel_fused_kernel,
        out_shape=jax.ShapeDtypeStruct((B, S, n_pad), out_dtype),
        grid_spec=grid_spec,
        compiler_params=pltpu.CompilerParams(
            dimension_semantics=("parallel",),
            vmem_limit_bytes=policy["limit"]),
    )(encoded_text, s2t, slen, w_all, b_all, cmask)

    # TODO(synk): a fused downstream loss should consume the packed
    # (B, S, Npad) slab directly instead of re-slicing four strided views.
    pred_sub_heads = fused_out[:, :, 0:1]
    pred_sub_tails = fused_out[:, :, 1:2]
    pred_obj_heads = fused_out[:, :, 2:2 + R]
    pred_obj_tails = fused_out[:, :, 2 + R:2 + 2 * R]
    return pred_sub_heads, pred_sub_tails, pred_obj_heads, pred_obj_tails


def casrel_forward(input_ids, mask, sub_head2tail, sub_len, params, fused_head,
                   num_rel):
    """Full CasRel.forward: encoder stand-in (glue) + fused Pallas head."""
    # get_encoded_text stand-in: deterministic embedding lookup (bf16).
    encoded_text = params["embedding"][input_ids]          # (B, S, D)

    psh, pst, poh, pot = casrel_head_pallas(
        encoded_text, sub_head2tail, sub_len, fused_head, num_rel)
    return {
        "pred_sub_heads": psh,
        "pred_sub_tails": pst,
        "pred_obj_heads": poh,
        "pred_obj_tails": pot,
        "mask": mask,
    }


def _reference_forward(input_ids, mask, sub_head2tail, sub_len, params):
    """Plain-JAX f32 reference mirroring the PyTorch forward (validation)."""
    f32 = jnp.float32
    hi = jax.lax.Precision.HIGHEST
    enc = params["embedding"][input_ids].astype(f32)
    w_sh = params["w_sh"].astype(f32)
    w_st = params["w_st"].astype(f32)
    w_oh = params["w_oh"].astype(f32)
    w_ot = params["w_ot"].astype(f32)

    psh = jax.nn.sigmoid(jnp.matmul(enc, w_sh, precision=hi) + params["b_sh"])
    pst = jax.nn.sigmoid(jnp.matmul(enc, w_st, precision=hi) + params["b_st"])
    s2t = sub_head2tail[:, None, :].astype(f32)             # (B, 1, S)
    sub = jnp.matmul(s2t, enc, precision=hi)                # (B, 1, D)
    sub = sub / sub_len[:, None, :]                         # (B, 1, 1) bcast
    enc2 = enc + sub
    poh = jax.nn.sigmoid(jnp.matmul(enc2, w_oh, precision=hi) + params["b_oh"])
    pot = jax.nn.sigmoid(jnp.matmul(enc2, w_ot, precision=hi) + params["b_ot"])
    return psh, pst, poh, pot


def _init_params(key, vocab, D, R, dtype=jnp.bfloat16):
    ks = jax.random.split(key, 9)
    scale = 1.0 / jnp.sqrt(D)
    u = lambda k, shape: jax.random.uniform(k, shape, jnp.float32, -scale, scale)
    return {
        "embedding": (jax.random.normal(ks[0], (vocab, D), jnp.float32)
                      * 0.1).astype(dtype),
        "w_sh": u(ks[1], (D, 1)).astype(dtype),
        "b_sh": u(ks[2], (1, 1)),
        "w_st": u(ks[3], (D, 1)).astype(dtype),
        "b_st": u(ks[4], (1, 1)),
        "w_oh": u(ks[5], (D, R)).astype(dtype),
        "b_oh": u(ks[6], (1, R)),
        "w_ot": u(ks[7], (D, R)).astype(dtype),
        "b_ot": u(ks[8], (1, R)),
    }


if __name__ == "__main__":
    B, S, D, R, VOCAB = 2, 8, 32, 4, 50

    key = jax.random.PRNGKey(0)
    k_par, k_ids, k_span = jax.random.split(key, 3)

    params = _init_params(k_par, VOCAB, D, R)
    # Fused head params built once, outside the per-call path.
    fused_head = prepare_casrel_head(params, compute_dtype=jnp.bfloat16)

    input_ids = jax.random.randint(k_ids, (B, S), 0, VOCAB, jnp.int32)
    mask = jnp.ones((B, S), jnp.float32)

    # subject span: positions 1..3 for batch 0, 2..4 for batch 1
    sub_head2tail = jnp.zeros((B, S), jnp.float32)
    sub_head2tail = sub_head2tail.at[0, 1:4].set(1.0).at[1, 2:5].set(1.0)
    sub_len = jnp.array([[3.0], [3.0]], jnp.float32)        # (B, 1)

    fwd = jax.jit(casrel_forward, static_argnums=(6,))
    out = fwd(input_ids, mask, sub_head2tail, sub_len, params, fused_head, R)
    out = jax.tree_util.tree_map(jax.block_until_ready, out)

    # Sanity check against plain-JAX f32 reference.  Kernel outputs are bf16
    # (halved HBM write), so compare with a bf16-appropriate tolerance.
    ref = _reference_forward(input_ids, mask, sub_head2tail, sub_len, params)
    names = ["pred_sub_heads", "pred_sub_tails", "pred_obj_heads", "pred_obj_tails"]
    for name, r in zip(names, ref):
        assert out[name].shape == r.shape, name
        assert jnp.allclose(out[name].astype(jnp.float32), r,
                            atol=5e-3, rtol=5e-3), name

    print("KERNEL_OK")
</pallas_src>

<mosaic_0001>
module attributes {stable_mosaic.version = 11 : i64} {
  func.func @_casrel_fused_kernel(%arg0: i32, %arg1: memref<1x8x32xbf16, #tpu.memory_space<vmem>>, %arg2: memref<1x1x8xbf16, #tpu.memory_space<vmem>>, %arg3: memref<1x1x1xf32, #tpu.memory_space<vmem>>, %arg4: memref<32x128xbf16, #tpu.memory_space<vmem>>, %arg5: memref<1x128xf32, #tpu.memory_space<vmem>>, %arg6: memref<1x128xf32, #tpu.memory_space<vmem>>, %arg7: memref<1x8x128xbf16, #tpu.memory_space<vmem>>) attributes {dimension_semantics = [#tpu.dimension_semantics<parallel>], iteration_bounds = array<i64: 2>, scalar_prefetch = 0 : i64, scratch_operands = 0 : i64, tpu.core_type = #tpu.core_type<tc>, window_params = [{transform_indices = @transform_0, window_bounds = array<i64: 1, 8, 32>}, {transform_indices = @transform_1, window_bounds = array<i64: 1, 1, 8>}, {transform_indices = @transform_2, window_bounds = array<i64: 1, 1, 1>}, {pipeline_mode = #tpu.pipeline_mode<synchronous>, transform_indices = @transform_3, window_bounds = array<i64: 32, 128>}, {pipeline_mode = #tpu.pipeline_mode<synchronous>, transform_indices = @transform_4, window_bounds = array<i64: 1, 128>}, {pipeline_mode = #tpu.pipeline_mode<synchronous>, transform_indices = @transform_5, window_bounds = array<i64: 1, 128>}, {transform_indices = @transform_6, window_bounds = array<i64: 1, 8, 128>}]} {
    %c0 = arith.constant 0 : index
    %c0_0 = arith.constant 0 : index
    %c0_1 = arith.constant 0 : index
    %0 = vector.load %arg1[%c0, %c0_0, %c0_1] : memref<1x8x32xbf16, #tpu.memory_space<vmem>>, vector<1x8x32xbf16>
    %c0_2 = arith.constant 0 : index
    %c0_3 = arith.constant 0 : index
    %1 = vector.load %arg4[%c0_2, %c0_3] : memref<32x128xbf16, #tpu.memory_space<vmem>>, vector<32x128xbf16>
    %c0_4 = arith.constant 0 : index
    %c0_5 = arith.constant 0 : index
    %c0_6 = arith.constant 0 : index
    %2 = vector.load %arg2[%c0_4, %c0_5, %c0_6] : memref<1x1x8xbf16, #tpu.memory_space<vmem>>, vector<1x1x8xbf16>
    "tpu.trace_start"() <{level = 10 : i32, message = "bks,bsd->bkd"}> : () -> ()
    %cst = arith.constant dense<0.000000e+00> : vector<1x1x32xf32>
    %3 = tpu.matmul %2, %0, %cst {dimension_numbers = #tpu.dot_dimension_numbers<[2], [1], [1], [2], [0, 0, 0, 1, 1, 2], [0], [0]>} : vector<1x1x8xbf16>, vector<1x8x32xbf16>, vector<1x1x32xf32> -> vector<1x1x32xf32>
    "tpu.trace_stop"() : () -> ()
    %4 = vector.shape_cast %3 : vector<1x1x32xf32> to vector<1x32xf32>
    %c0_7 = arith.constant 0 : index
    %c0_8 = arith.constant 0 : index
    %c0_9 = arith.constant 0 : index
    %5 = vector.load %arg3[%c0_7, %c0_8, %c0_9] : memref<1x1x1xf32, #tpu.memory_space<vmem>>, vector<1x1x1xf32>
    %6 = vector.shape_cast %5 : vector<1x1x1xf32> to vector<1x1xf32>
    %7 = vector.broadcast %6 : vector<1x1xf32> to vector<1x32xf32>
    %8 = arith.divf %4, %7 : vector<1x32xf32>
    %9 = arith.truncf %8 : vector<1x32xf32> to vector<1x32xbf16>
    %cst_10 = arith.constant dense<0.000000e+00> : vector<1x128xf32>
    %10 = tpu.matmul %9, %1, %cst_10 {dimension_numbers = #tpu.dot_dimension_numbers<[1], [0], [0], [1], [0, 0, 1, 1], [], []>} : vector<1x32xbf16>, vector<32x128xbf16>, vector<1x128xf32> -> vector<1x128xf32>
    %c0_11 = arith.constant 0 : index
    %c0_12 = arith.constant 0 : index
    %11 = vector.load %arg6[%c0_11, %c0_12] : memref<1x128xf32, #tpu.memory_space<vmem>>, vector<1x128xf32>
    %12 = arith.mulf %10, %11 : vector<1x128xf32>
    %c0_13 = arith.constant 0 : index
    %c0_14 = arith.constant 0 : index
    %13 = vector.load %arg5[%c0_13, %c0_14] : memref<1x128xf32, #tpu.memory_space<vmem>>, vector<1x128xf32>
    %14 = arith.addf %12, %13 : vector<1x128xf32>
    %15 = vector.shape_cast %0 : vector<1x8x32xbf16> to vector<8x32xbf16>
    %cst_15 = arith.constant dense<0.000000e+00> : vector<8x128xf32>
    %16 = tpu.matmul %15, %1, %cst_15 {dimension_numbers = #tpu.dot_dimension_numbers<[1], [0], [0], [1], [0, 0, 1, 1], [], []>} : vector<8x32xbf16>, vector<32x128xbf16>, vector<8x128xf32> -> vector<8x128xf32>
    %17 = vector.shape_cast %16 : vector<8x128xf32> to vector<1x8x128xf32>
    %18 = vector.shape_cast %14 : vector<1x128xf32> to vector<1x1x128xf32>
    %19 = vector.broadcast %18 : vector<1x1x128xf32> to vector<1x8x128xf32>
    %20 = arith.addf %17, %19 : vector<1x8x128xf32>
    %21 = arith.negf %20 : vector<1x8x128xf32>
    %22 = math.exp %21 : vector<1x8x128xf32>
    %cst_16 = arith.constant 1.000000e+00 : f32
    %23 = vector.broadcast %cst_16 : f32 to vector<1x8x128xf32>
    %24 = arith.addf %23, %22 : vector<1x8x128xf32>
    %25 = arith.divf %23, %24 : vector<1x8x128xf32>
    %26 = arith.truncf %25 : vector<1x8x128xf32> to vector<1x8x128xbf16>
    %c0_17 = arith.constant 0 : index
    %c0_18 = arith.constant 0 : index
    %c0_19 = arith.constant 0 : index
    %27 = vector.load %arg7[%c0_17, %c0_18, %c0_19] : memref<1x8x128xbf16, #tpu.memory_space<vmem>>, vector<1x8x128xbf16>
    tpu.vector_store %arg7[%c0_17, %c0_18, %c0_19], %26 {strides = array<i32>} : memref<1x8x128xbf16, #tpu.memory_space<vmem>>, vector<1x8x128xbf16>,
    return
  }
  func.func @transform_0(%arg0: i32) -> (i32, i32, i32) {
    %c0_i32 = arith.constant 0 : i32
    %c0_i32_0 = arith.constant 0 : i32
    %c0_i32_1 = arith.constant 0 : i32
    return %arg0, %c0_i32, %c0_i32_0 : i32, i32, i32
  }
  func.func @transform_1(%arg0: i32) -> (i32, i32, i32) {
    %c0_i32 = arith.constant 0 : i32
    %c0_i32_0 = arith.constant 0 : i32
    %c0_i32_1 = arith.constant 0 : i32
    return %arg0, %c0_i32, %c0_i32_0 : i32, i32, i32
  }
  func.func @transform_2(%arg0: i32) -> (i32, i32, i32) {
    %c0_i32 = arith.constant 0 : i32
    %c0_i32_0 = arith.constant 0 : i32
    %c0_i32_1 = arith.constant 0 : i32
    return %arg0, %c0_i32, %c0_i32_0 : i32, i32, i32
  }
  func.func @transform_3(%arg0: i32) -> (i32, i32) {
    %c0_i32 = arith.constant 0 : i32
    %c0_i32_0 = arith.constant 0 : i32
    %c0_i32_1 = arith.constant 0 : i32
    return %c0_i32, %c0_i32_0 : i32, i32
  }
  func.func @transform_4(%arg0: i32) -> (i32, i32) {
    %c0_i32 = arith.constant 0 : i32
    %c0_i32_0 = arith.constant 0 : i32
    %c0_i32_1 = arith.constant 0 : i32
    return %c0_i32, %c0_i32_0 : i32, i32
  }
  func.func @transform_5(%arg0: i32) -> (i32, i32) {
    %c0_i32 = arith.constant 0 : i32
    %c0_i32_0 = arith.constant 0 : i32
    %c0_i32_1 = arith.constant 0 : i32
    return %c0_i32, %c0_i32_0 : i32, i32
  }
  func.func @transform_6(%arg0: i32) -> (i32, i32, i32) {
    %c0_i32 = arith.constant 0 : i32
    %c0_i32_0 = arith.constant 0 : i32
    %c0_i32_1 = arith.constant 0 : i32
    return %arg0, %c0_i32, %c0_i32_0 : i32, i32, i32
  }
}

</mosaic_0001>

<llo_original>
// kernel: casrel_forward.1
$region0: #{casrel_forward.1}
  #allocation0 [shape = 'u32[]', space=smem, size = 0x4, offset = 0x4, fixed_abs, tag = 'smem constant byte address 0x4 - core index']
  #allocation1 [shape = 'u32[72,128]{1,0:T(1,128)}', space=vmem, size = 0x9000, scoped, tag = 'internal scratch']
  %s0 = inlined_call_operand.vmem [shape: bf16[2,8,32], index: 0, kind: input, shape index: {}]
  %s1 = inlined_call_operand.vmem [shape: bf16[2,1,8], index: 1, kind: input, shape index: {}]
  %s2 = inlined_call_operand.vmem [shape: f32[2,1,1], index: 2, kind: input, shape index: {}]
  %s3 = inlined_call_operand.vmem [shape: bf16[32,128], index: 3, kind: input, shape index: {}]
  %s4 = inlined_call_operand.vmem [shape: f32[1,128], index: 4, kind: input, shape index: {}]
  %s5 = inlined_call_operand.vmem [shape: f32[1,128], index: 5, kind: input, shape index: {}]
  %s6 = inlined_call_operand.vmem [shape: bf16[2,8,128], index: 6, kind: output, shape index: {}]
  %s7 = sld [smem:[#allocation0]]
  $region57: #{casrel_forward.1} parent=0
    _
  %s9 = ssub.s32 1, %s7
  %s10 = scalar_select 0, %s9, %s7
  loop: start=0, step=1, limit=4
  $region2: #{casrel_forward.1} parent=0 // loop_pre_header
    _
  $region3: #{casrel_forward.1} parent=0 // loop_header
    %s12 = sphi 0, %s16
    %p13 = scmp.ge.s32.totalorder %s12, 4
    %s22 = sphi 0, %s24
    %s25 = sphi 0, %s22
    %s26 = sphi 0, %s25
    %s42 = sphi 0, %s26
    %s48 = sphi 0, %s50
    %s51 = sphi 0, %s48
    %s52 = sphi 0, %s51
    %s68 = sphi 0, %s52
    %s74 = sphi 0, %s76
    %s77 = sphi 0, %s74
    %s78 = sphi 0, %s77
    %s94 = sphi 0, %s78
    %s98 = sphi 0, %s98
    %s100 = sphi 0, %s98
    %s101 = sphi 0, %s100
    %s115 = sphi 0, %s101
    %s119 = sphi 0, %s119
    %s121 = sphi 0, %s119
    %s122 = sphi 0, %s121
    %s136 = sphi 0, %s122
    %s140 = sphi 0, %s140
    %s142 = sphi 0, %s140
    %s143 = sphi 0, %s142
    %s157 = sphi 0, %s143
    %s163 = sphi 0, %s165
    %s166 = sphi 0, %s163
    %s167 = sphi 0, %s166
    %s183 = sphi 0, %s167
  $region4: #{casrel_forward.1} parent=0 // loop_header_branch
    %15 = sbr.rel (%p13) target = $region8
  $region5: #{casrel_forward.1} parent=0 // loop_body
    %s17 = ssub.s32 %s12, 1
    %s18 = ssub.s32 %s12, 2
    %s19 = sadd.s32 %s12, 1
    %s20 = ssub.s32 %s12, %s19
    %p21 = scmp.eq.s32.totalorder %s20, 0
    %s23 = sadd.s32 %s22, 1
    %s24 = scalar_select %p21, %s22, %s23
    %p27 = pneg %p21
    %p28 = scmp.eq.s32.totalorder %s12, 1
    %p29 = por %p27, %p28
    %p30 = scmp.ne.s32.totalorder %s22, %s25
    %p31 = scmp.eq.s32.totalorder %s12, 0
    %p32 = por %p30, %p31
    %p33 = scmp.ne.s32.totalorder %s22, %s25
    %p34 = scmp.eq.s32.totalorder %s17, 1
    %p35 = por %p33, %p34
    %p36 = scmp.ne.s32.totalorder %s25, %s26
    %p37 = scmp.eq.s32.totalorder %s17, 0
    %p38 = por %p36, %p37
    %p39 = scmp.ne.s32.totalorder %s25, %s26
    %p40 = scmp.eq.s32.totalorder %s18, 1
    %p41 = por %p39, %p40
    %p43 = scmp.ne.s32.totalorder %s26, %s42
    %p44 = scmp.eq.s32.totalorder %s18, 0
    %p45 = por %p43, %p44
    %s46 = ssub.s32 %s12, %s19
    %p47 = scmp.eq.s32.totalorder %s46, 0
    %s49 = sadd.s32 %s48, 1
    %s50 = scalar_select %p47, %s48, %s49
    %p53 = pneg %p47
    %p54 = scmp.eq.s32.totalorder %s12, 1
    %p55 = por %p53, %p54
    %p56 = scmp.ne.s32.totalorder %s48, %s51
    %p57 = scmp.eq.s32.totalorder %s12, 0
    %p58 = por %p56, %p57
    %p59 = scmp.ne.s32.totalorder %s48, %s51
    %p60 = scmp.eq.s32.totalorder %s17, 1
    %p61 = por %p59, %p60
    %p62 = scmp.ne.s32.totalorder %s51, %s52
    %p63 = scmp.eq.s32.totalorder %s17, 0
    %p64 = por %p62, %p63
    %p65 = scmp.ne.s32.totalorder %s51, %s52
    %p66 = scmp.eq.s32.totalorder %s18, 1
    %p67 = por %p65, %p66
    %p69 = scmp.ne.s32.totalorder %s52, %s68
    %p70 = scmp.eq.s32.totalorder %s18, 0
    %p71 = por %p69, %p70
    %s72 = ssub.s32 %s12, %s19
    %p73 = scmp.eq.s32.totalorder %s72, 0
    %s75 = sadd.s32 %s74, 1
    %s76 = scalar_select %p73, %s74, %s75
    %p79 = pneg %p73
    %p80 = scmp.eq.s32.totalorder %s12, 1
    %p81 = por %p79, %p80
    %p82 = scmp.ne.s32.totalorder %s74, %s77
    %p83 = scmp.eq.s32.totalorder %s12, 0
    %p84 = por %p82, %p83
    %p85 = scmp.ne.s32.totalorder %s74, %s77
    %p86 = scmp.eq.s32.totalorder %s17, 1
    %p87 = por %p85, %p86
    %p88 = scmp.ne.s32.totalorder %s77, %s78
    %p89 = scmp.eq.s32.totalorder %s17, 0
    %p90 = por %p88, %p89
    %p91 = scmp.ne.s32.totalorder %s77, %s78
    %p92 = scmp.eq.s32.totalorder %s18, 1
    %p93 = por %p91, %p92
    %p95 = scmp.ne.s32.totalorder %s78, %s94
    %p96 = scmp.eq.s32.totalorder %s18, 0
    %p97 = por %p95, %p96
    %s99 = sadd.s32 %s98, 1
    %p102 = scmp.eq.s32.totalorder %s12, 1
    %p103 = scmp.ne.s32.totalorder %s98, %s100
    %p104 = scmp.eq.s32.totalorder %s12, 0
    %p105 = por %p103, %p104
    %p106 = scmp.ne.s32.totalorder %s98, %s100
    %p107 = scmp.eq.s32.totalorder %s17, 1
    %p108 = por %p106, %p107
    %p109 = scmp.ne.s32.totalorder %s100, %s101
    %p110 = scmp.eq.s32.totalorder %s17, 0
    %p111 = por %p109, %p110
    %p112 = scmp.ne.s32.totalorder %s100, %s101
    %p113 = scmp.eq.s32.totalorder %s18, 1
    %p114 = por %p112, %p113
    %p116 = scmp.ne.s32.totalorder %s101, %s115
    %p117 = scmp.eq.s32.totalorder %s18, 0
    %p118 = por %p116, %p117
    %s120 = sadd.s32 %s119, 1
    %p123 = scmp.eq.s32.totalorder %s12, 1
    %p124 = scmp.ne.s32.totalorder %s119, %s121
    %p125 = scmp.eq.s32.totalorder %s12, 0
    %p126 = por %p124, %p125
    %p127 = scmp.ne.s32.totalorder %s119, %s121
    %p128 = scmp.eq.s32.totalorder %s17, 1
    %p129 = por %p127, %p128
    %p130 = scmp.ne.s32.totalorder %s121, %s122
    %p131 = scmp.eq.s32.totalorder %s17, 0
    %p132 = por %p130, %p131
    %p133 = scmp.ne.s32.totalorder %s121, %s122
    %p134 = scmp.eq.s32.totalorder %s18, 1
    %p135 = por %p133, %p134
    %p137 = scmp.ne.s32.totalorder %s122, %s136
    %p138 = scmp.eq.s32.totalorder %s18, 0
    %p139 = por %p137, %p138
    %s141 = sadd.s32 %s140, 1
    %p144 = scmp.eq.s32.totalorder %s12, 1
    %p145 = scmp.ne.s32.totalorder %s140, %s142
    %p146 = scmp.eq.s32.totalorder %s12, 0
    %p147 = por %p145, %p146
    %p148 = scmp.ne.s32.totalorder %s140, %s142
    %p149 = scmp.eq.s32.totalorder %s17, 1
    %p150 = por %p148, %p149
    %p151 = scmp.ne.s32.totalorder %s142, %s143
    %p152 = scmp.eq.s32.totalorder %s17, 0
    %p153 = por %p151, %p152
    %p154 = scmp.ne.s32.totalorder %s142, %s143
    %p155 = scmp.eq.s32.totalorder %s18, 1
    %p156 = por %p154, %p155
    %p158 = scmp.ne.s32.totalorder %s143, %s157
    %p159 = scmp.eq.s32.totalorder %s18, 0
    %p160 = por %p158, %p159
    %s161 = ssub.s32 %s12, %s19
    %p162 = scmp.eq.s32.totalorder %s161, 0
    %s164 = sadd.s32 %s163, 1
    %s165 = scalar_select %p162, %s163, %s164
    %p168 = pneg %p162
    %p169 = scmp.eq.s32.totalorder %s12, 1
    %p170 = por %p168, %p169
    %p171 = scmp.ne.s32.totalorder %s163, %s166
    %p172 = scmp.eq.s32.totalorder %s12, 0
    %p173 = por %p171, %p172
    %p174 = scmp.ne.s32.totalorder %s163, %s166
    %p175 = scmp.eq.s32.totalorder %s17, 1
    %p176 = por %p174, %p175
    %p177 = scmp.ne.s32.totalorder %s166, %s167
    %p178 = scmp.eq.s32.totalorder %s17, 0
    %p179 = por %p177, %p178
    %p180 = scmp.ne.s32.totalorder %s166, %s167
    %p181 = scmp.eq.s32.totalorder %s18, 1
    %p182 = por %p180, %p181
    %p184 = scmp.ne.s32.totalorder %s167, %s183
    %p185 = scmp.eq.s32.totalorder %s18, 0
    %p186 = por %p184, %p185
    %p187 = scmp.le.s32.totalorder 1, %s12
    %p188 = scmp.lt.s32.totalorder %s12, 3
    %p189 = pnand %p187, %p188
    %p190 = pneg %p189
    // Predicated region
    $region9: #{casrel_forward.1} parent=5 // pred_check
      _
    $region10: #{casrel_forward.1} parent=5 // pred_check_branch
      %192 = sbr.rel (%p189) target = $region12
    $region11: #{casrel_forward.1} parent=5 // pred_region
      %s193 = ssub.s32 %s12, 1
      // Predicated region
      $region13: #{casrel_forward.1} parent=11 // pred_check
        %p194 = pneg %p111
      $region14: #{casrel_forward.1} parent=11 // pred_check_branch
        %196 = sbr.rel (%p194) target = $region16
      $region15: #{casrel_forward.1} parent=11 // pred_region
        _
      $region16: #{casrel_forward.1} parent=11 // pred_fallthru
        _
      // Predicated region
      $region17: #{casrel_forward.1} parent=11 // pred_check
        %p197 = pneg %p132
      $region18: #{casrel_forward.1} parent=11 // pred_check_branch
        %199 = sbr.rel (%p197) target = $region20
      $region19: #{casrel_forward.1} parent=11 // pred_region
        _
      $region20: #{casrel_forward.1} parent=11 // pred_fallthru
        _
      // Predicated region
      $region21: #{casrel_forward.1} parent=11 // pred_check
        %p200 = pneg %p153
      $region22: #{casrel_forward.1} parent=11 // pred_check_branch
        %202 = sbr.rel (%p200) target = $region24
      $region23: #{casrel_forward.1} parent=11 // pred_region
        _
      $region24: #{casrel_forward.1} parent=11 // pred_fallthru
        _
    $region12: #{casrel_forward.1} parent=5 // pred_fallthru
      _
    %p203 = scmp.lt.s32.totalorder %s12, 2
    // Predicated region
    $region25: #{casrel_forward.1} parent=5 // pred_check
      %p204 = pneg %p203
    $region26: #{casrel_forward.1} parent=5 // pred_check_branch
      %206 = sbr.rel (%p204) target = $region28
    $region27: #{casrel_forward.1} parent=5 // pred_region
      // Predicated region
      $region29: #{casrel_forward.1} parent=27 // pred_check
        %p207 = pneg %p32
      $region30: #{casrel_forward.1} parent=27 // pred_check_branch
        %209 = sbr.rel (%p207) target = $region32
      $region31: #{casrel_forward.1} parent=27 // pred_region
        %p210 = scmp.lt.s32.totalorder %s12, 1
        %s211 = scalar_select %p210, %s12, 1
        %s212 = smul.addr %s211, 4
        %s213 = scalar_lea.vmem %s0, %s212
      $region32: #{casrel_forward.1} parent=27 // pred_fallthru
        _
      // Predicated region
      $region33: #{casrel_forward.1} parent=27 // pred_check
        %p214 = pneg %p58
      $region34: #{casrel_forward.1} parent=27 // pred_check_branch
        %216 = sbr.rel (%p214) target = $region36
      $region35: #{casrel_forward.1} parent=27 // pred_region
        %p217 = scmp.lt.s32.totalorder %s12, 1
        %s218 = scalar_select %p217, %s12, 1
        %s219 = scalar_lea.vmem %s1, %s218
      $region36: #{casrel_forward.1} parent=27 // pred_fallthru
        _
      // Predicated region
      $region37: #{casrel_forward.1} parent=27 // pred_check
        %p220 = pneg %p84
      $region38: #{casrel_forward.1} parent=27 // pred_check_branch
        %222 = sbr.rel (%p220) target = $region40
      $region39: #{casrel_forward.1} parent=27 // pred_region
        %p223 = scmp.lt.s32.totalorder %s12, 1
        %s224 = scalar_select %p223, %s12, 1
        %s225 = scalar_lea.vmem %s2, %s224
      $region40: #{casrel_forward.1} parent=27 // pred_fallthru
        _
    $region28: #{casrel_forward.1} parent=5 // pred_fallthru
      _
    %p226 = scmp.le.s32.totalorder 1, %s12
    %p227 = scmp.lt.s32.totalorder %s12, 3
    %p228 = pnand %p226, %p227
    %p229 = pneg %p228
    // Predicated region
    $region41: #{casrel_forward.1} parent=5 // pred_check
      _
    $region42: #{casrel_forward.1} parent=5 // pred_check_branch
      %231 = sbr.rel (%p228) target = $region44
    $region43: #{casrel_forward.1} parent=5 // pred_region
      %s232 = ssub.s32 %s12, 1
      %p233 = scmp.lt.s32.totalorder %s17, 1
      %s234 = scalar_select %p233, %s17, 1
      %s235 = smul.addr %s234, 4
      %s236 = scalar_lea.vmem %s0, %s235
      %p237 = pneg %p38
      %p238 = pneg %p35
      %p239 = scmp.lt.s32.totalorder %s17, 1
      %s240 = scalar_select %p239, %s17, 1
      %s241 = scalar_lea.vmem %s1, %s240
      %p242 = pneg %p64
      %p243 = pneg %p61
      %p244 = scmp.lt.s32.totalorder %s17, 1
      %s245 = scalar_select %p244, %s17, 1
      %s246 = scalar_lea.vmem %s2, %s245
      %p247 = pneg %p90
      %p248 = pneg %p87
      %p249 = pneg %p111
      %p250 = pneg %p108
      %p251 = pneg %p132
      %p252 = pneg %p129
      %p253 = pneg %p153
      %p254 = pneg %p150
      %p255 = pneg %p179
      %p256 = pneg %p176
      %p257 = scmp.lt.s32.totalorder %s17, 1
      %s258 = scalar_select %p257, %s17, 1
      %s259 = smul.addr %s258, 4
      %s260 = scalar_lea.vmem %s6, %s259
      %p261 = scmp.lt.s32.totalorder %s17, 1
      %s262 = scalar_select %p261, %s17, 1
      %s263 = smul.addr %s262, 4
      %s264 = scalar_lea.vmem %s0, %s263
      %p265 = scmp.lt.s32.totalorder %s17, 1
      %s266 = scalar_select %p265, %s17, 1
      %s267 = scalar_lea.vmem %s1, %s266
      %p268 = scmp.lt.s32.totalorder %s17, 1
      %s269 = scalar_select %p268, %s17, 1
      %s270 = scalar_lea.vmem %s2, %s269
      %p271 = scmp.lt.s32.totalorder %s17, 1
      %s272 = scalar_select %p271, %s17, 1
      %s273 = smul.addr %s272, 4
      %s274 = scalar_lea.vmem %s6, %s273
      %v276 = vld [vmem:[%s264] sm:$0xf]
      %v277 = vld [vmem:[%s3] sm:$0xf]
      %v278 = vld [vmem:[%s3 + $0x4] sm:$0xf]
      %v279 = vld [vmem:[%s3 + $0x8] sm:$0xf]
      %v280 = vld [vmem:[%s3 + $0xc] sm:$0xf]
      %v281 = vld [vmem:[%s267] sm:$0x1]
      %vm282 = vcmask 64512
      %v284 = vsel %vm282, %v281, 0
      %vm286 = vcmask 1043456
      %v288 = vsel %vm286, %v276, 0
      %290 = vmatpush.bf16.msra.mxu0 0
      %291 = vmatpush.bf16.msra.mxu0 0
      %292 = vmatpush.bf16.msra.mxu0 0
      %293 = vmatpush.bf16.msra.mxu0 0
      %294 = vmatpush.bf16.msra.mxu0 0
      %295 = vmatpush.bf16.msra.mxu0 0
      %296 = vmatpush.bf16.msra.mxu0 0
      %297 = vmatpush.bf16.msra.mxu0 %v288
      %298 = vmatmul.bf16.gmra.mxu0 %v284
      %v299 = vpop.f32.mrf.mxu0
      %v300 = vadd.f32 0.0, %v299
      %v301 = vpop.f32.mrf.mxu0
      %302 = vdwg.mxu0
      %v303 = vld [vmem:[%s270] sm:$0x1]
      %305 = vset.pattern.permute.xlu0 0
      %306 = vperm.xlu0 %305, %v303
      %v307 = vpop.permute.xlu0 %306
      %v309 = vperm.slane %v307, 0
      %v310 = vrcp.pop %v309
      %v311 = vmul.f32 %v309, %v310
      %v312 = vsub.f32 1.0, %v311
      %v313 = vmul.f32 %v310, %v312
      %v314 = vadd.f32 %v310, %v313
      %vm315 = vweird.f32 %v309
      %vm316 = vweird.f32 %v310
      %vm317 = vmor %vm315, %vm316
      %v318 = vsel %vm317, %v310, %v314
      %v319 = vand.u32 2147483647, %v309
      %vm320 = vcmp.eq.f32.partialorder %v319, 8.507059e+37
      %v321 = vand.u32 %v309, 2147483648
      %v322 = vor.u32 1.1754944e-38, %v321
      %v323 = vsel %vm320, %v322, %v318
      %v324 = vmul.f32 %v300, %v323
      %v325 = vpack.c.bf16 %v324, %v324
      %v330 = vunpack.c.l.b16 %v277
      %v331 = vunpack.c.l.b16 %v278
      %v332 = vunpack.c.l.b16 %v279
      %v333 = vunpack.c.l.b16 %v280
      %v334 = vpack.c.b16 %v331, %v330
      %v335 = vpack.c.b16 %v333, %v332
      %vm338 = vcmask 261120
      %v340 = vsel %vm338, %v325, 0
      %342 = vmatpush.bf16.msra.mxu0 0
      %343 = vmatpush.bf16.msra.mxu0 0
      %344 = vmatpush.bf16.msra.mxu0 0
      %345 = vmatpush.bf16.msra.mxu0 0
      %346 = vmatpush.bf16.msra.mxu0 0
      %347 = vmatpush.bf16.msra.mxu0 0
      %348 = vmatpush.bf16.msra.mxu0 %v335
      %349 = vmatpush.bf16.msra.mxu0 %v334
      %350 = vmatmul.bf16.gmra.mxu0 %v340
      %v351 = vpop.f32.mrf.mxu0
      %v352 = vadd.f32 0.0, %v351
      %v353 = vpop.f32.mrf.mxu0
      %354 = vdwg.mxu0
      %v355 = vld [vmem:[%s5] sm:$0x1]
      %v356 = vmul.f32 %v352, %v355
      %v357 = vld [vmem:[%s4] sm:$0x1]
      %v358 = vadd.f32 %v356, %v357
      %v359 = vsel %vm338, %v276, 0
      %361 = vmatpush.bf16.msra.mxu0 0
      %362 = vmatpush.bf16.msra.mxu0 0
      %363 = vmatpush.bf16.msra.mxu0 0
      %364 = vmatpush.bf16.msra.mxu0 0
      %365 = vmatpush.bf16.msra.mxu0 0
      %366 = vmatpush.bf16.msra.mxu0 0
      %367 = vmatpush.bf16.msra.mxu0 %v335
      %368 = vmatpush.bf16.msra.mxu0 %v334
      %369 = vmatmul.bf16.gmra.mxu0 %v359
      %v370 = vpop.f32.mrf.mxu0
      %v371 = vadd.f32 0.0, %v370
      %v372 = vpop.f32.mrf.mxu0
      %373 = vdwg.mxu0
      %v374 = vperm.slane %v358, 0
      %v375 = vadd.f32 %v371, %v374
      %v376 = vxor.u32 %v375, 2147483648
      %v377 = vmul.f32 %v376, 1.442695
      %v378 = vpow.pop %v377
      %v379 = vadd.f32 %v378, 1.0
      %v380 = vrcp.pop %v379
      %v381 = vmul.f32 %v379, %v380
      %v382 = vsub.f32 1.0, %v381
      %v383 = vmul.f32 %v380, %v382
      %v384 = vadd.f32 %v380, %v383
      %vm385 = vweird.f32 %v379
      %vm386 = vweird.f32 %v380
      %vm387 = vmor %vm385, %vm386
      %v388 = vsel %vm387, %v380, %v384
      %v389 = vand.u32 2147483647, %v379
      %vm390 = vcmp.eq.f32.partialorder %v389, 8.507059e+37
      %v391 = vand.u32 %v379, 2147483648
      %v392 = vor.u32 1.1754944e-38, %v391
      %v393 = vsel %vm390, %v392, %v388
      %v394 = vmul.f32 1.0, %v393
      %v395 = vpack.c.bf16 %v394, %v394
      %396 = vst [vmem:[%s274] sm:$0xf] %v395
      %p397 = scmp.lt.s32.totalorder %s17, 1
      %s398 = scalar_select %p397, %s17, 1
      %s399 = smul.addr %s398, 4
      %s400 = scalar_lea.vmem %s6, %s399
      // Predicated region
      $region45: #{casrel_forward.1} parent=43 // pred_check
        %p401 = pneg %p176
      $region46: #{casrel_forward.1} parent=43 // pred_check_branch
        %403 = sbr.rel (%p401) target = $region48
      $region47: #{casrel_forward.1} parent=43 // pred_region
        _
      $region48: #{casrel_forward.1} parent=43 // pred_fallthru
        _
    $region44: #{casrel_forward.1} parent=5 // pred_fallthru
      _
    %p404 = scmp.le.s32.totalorder 2, %s12
    // Predicated region
    $region49: #{casrel_forward.1} parent=5 // pred_check
      %p405 = pneg %p404
    $region50: #{casrel_forward.1} parent=5 // pred_check_branch
      %407 = sbr.rel (%p405) target = $region52
    $region51: #{casrel_forward.1} parent=5 // pred_region
      %s408 = ssub.s32 %s12, 2
      // Predicated region
      $region53: #{casrel_forward.1} parent=51 // pred_check
        %p409 = pneg %p182
      $region54: #{casrel_forward.1} parent=51 // pred_check_branch
        %411 = sbr.rel (%p409) target = $region56
      $region55: #{casrel_forward.1} parent=51 // pred_region
        %p412 = scmp.lt.s32.totalorder %s18, 1
        %s413 = scalar_select %p412, %s18, 1
        %s414 = smul.addr %s413, 4
        %s415 = scalar_lea.vmem %s6, %s414
      $region56: #{casrel_forward.1} parent=51 // pred_fallthru
        _
    $region52: #{casrel_forward.1} parent=5 // pred_fallthru
      _
  $region6: #{casrel_forward.1} parent=0 // loop_footer
    %s16 = sadd.s32 1, %s12
  $region7: #{casrel_forward.1} parent=0 // loop_footer_branch
    %11 = sbr.rel target = $region3
  $region8: #{casrel_forward.1} parent=0 // loop_exit
    _

</llo_original>
